<compile_context>
chip_gen: v5e
topology: v5e:2x2
jax: 0.10.0
libtpu: 0.0.40
codegen_flags: <defaults>
</compile_context>

<pallas_src>
import jax
import jax.numpy as jnp
from jax.experimental import pallas as pl
from jax.experimental.pallas import tpu as pltpu

EMBEDDING_DIM = 30  # nn.Embedding(..., embedding_dim=30) default from the module


def _mf_dot_kernel(u_ref, v_ref, out_ref):
    # u_ref, v_ref: (D_pad, TB) VMEM tiles — embedding dim on sublanes, batch
    # on lanes (zero-padded rows/cols contribute 0 to the sum).
    # out_ref:      (1, TB) lane-dense output block, one full-block store.
    out_ref[...] = jnp.sum(u_ref[...] * v_ref[...], axis=0, keepdims=True)


def matrix_factorization_forward(user_indices, item_indices,
                                 user_embedding, item_embedding,
                                 *, tb=128):
    """Returns (B,) float32 scores, identical to the PyTorch forward.

    tb: examples per grid step (multiple of 128). 128 is fine for small B;
    use 512-1024 for large batches on v6e/v7x to approach the HBM roofline.
    """
    B = user_indices.shape[0]
    D = user_embedding.shape[1]

    # Bulk gather via XLA (one full-bandwidth pass over the needed rows).
    u = jnp.take(user_embedding, user_indices.astype(jnp.int32), axis=0)  # (B, D)
    v = jnp.take(item_embedding, item_indices.astype(jnp.int32), axis=0)  # (B, D)

    # Layout plumbing: batch on lanes, embedding dim on sublanes.
    b_pad = pl.cdiv(B, tb) * tb          # lane axis: multiple of tb (>=128)
    d_pad = pl.cdiv(D, 8) * 8            # sublane axis: multiple of 8
    ut = jnp.pad(u.astype(jnp.float32).T, ((0, d_pad - D), (0, b_pad - B)))
    vt = jnp.pad(v.astype(jnp.float32).T, ((0, d_pad - D), (0, b_pad - B)))

    out = pl.pallas_call(
        _mf_dot_kernel,
        out_shape=jax.ShapeDtypeStruct((1, b_pad), jnp.float32),
        grid=(b_pad // tb,),
        in_specs=[
            pl.BlockSpec((d_pad, tb), lambda i: (0, i)),
            pl.BlockSpec((d_pad, tb), lambda i: (0, i)),
        ],
        out_specs=pl.BlockSpec((1, tb), lambda i: (0, i)),
        compiler_params=pltpu.CompilerParams(
            dimension_semantics=("parallel",)),  # independent per-block outputs
    )(ut, vt)

    return out[0, :B]  # (B,)


if __name__ == "__main__":
    num_users, num_items, batch = 10, 12, 8

    key = jax.random.PRNGKey(0)
    k_u, k_i, k_ui, k_ii = jax.random.split(key, 4)

    # nn.Embedding default init: weight ~ N(0, 1)
    user_emb = jax.random.normal(k_u, (num_users, EMBEDDING_DIM), dtype=jnp.float32)
    item_emb = jax.random.normal(k_i, (num_items, EMBEDDING_DIM), dtype=jnp.float32)

    user_idx = jax.random.randint(k_ui, (batch,), 0, num_users, dtype=jnp.int32)
    item_idx = jax.random.randint(k_ii, (batch,), 0, num_items, dtype=jnp.int32)

    out = matrix_factorization_forward(user_idx, item_idx, user_emb, item_emb)
    out = jax.block_until_ready(out)

    # Pure-JAX reference of the PyTorch forward.
    ref = jnp.sum(user_emb[user_idx] * item_emb[item_idx], axis=1)

    assert out.shape == (batch,), out.shape
    assert out.dtype == jnp.float32
    assert jnp.allclose(out, ref, atol=1e-5, rtol=1e-5), (out, ref)
    print("KERNEL_OK")
</pallas_src>

<mosaic_0001>
module attributes {stable_mosaic.version = 11 : i64} {
  func.func @_mf_dot_kernel(%arg0: i32, %arg1: memref<32x128xf32, #tpu.memory_space<vmem>>, %arg2: memref<32x128xf32, #tpu.memory_space<vmem>>, %arg3: memref<1x128xf32, #tpu.memory_space<vmem>>) attributes {dimension_semantics = [#tpu.dimension_semantics<parallel>], iteration_bounds = array<i64: 1>, scalar_prefetch = 0 : i64, scratch_operands = 0 : i64, tpu.core_type = #tpu.core_type<tc>, window_params = [{transform_indices = @transform_0, window_bounds = array<i64: 32, 128>}, {transform_indices = @transform_1, window_bounds = array<i64: 32, 128>}, {transform_indices = @transform_2, window_bounds = array<i64: 1, 128>}]} {
    %c0 = arith.constant 0 : index
    %c0_0 = arith.constant 0 : index
    %0 = vector.load %arg1[%c0, %c0_0] : memref<32x128xf32, #tpu.memory_space<vmem>>, vector<32x128xf32>
    %c0_1 = arith.constant 0 : index
    %c0_2 = arith.constant 0 : index
    %1 = vector.load %arg2[%c0_1, %c0_2] : memref<32x128xf32, #tpu.memory_space<vmem>>, vector<32x128xf32>
    %2 = arith.mulf %0, %1 : vector<32x128xf32>
    %cst = arith.constant dense<0.000000e+00> : vector<128xf32>
    %3 = vector.multi_reduction <add>, %2, %cst [0] : vector<32x128xf32> to vector<128xf32>
    %4 = vector.shape_cast %3 : vector<128xf32> to vector<1x128xf32>
    %c0_3 = arith.constant 0 : index
    %c0_4 = arith.constant 0 : index
    %5 = vector.load %arg3[%c0_3, %c0_4] : memref<1x128xf32, #tpu.memory_space<vmem>>, vector<1x128xf32>
    tpu.vector_store %arg3[%c0_3, %c0_4], %4 {strides = array<i32>} : memref<1x128xf32, #tpu.memory_space<vmem>>, vector<1x128xf32>,
    return
  }
  func.func @transform_0(%arg0: i32) -> (i32, i32) {
    %c0_i32 = arith.constant 0 : i32
    %c0_i32_0 = arith.constant 0 : i32
    return %c0_i32, %arg0 : i32, i32
  }
  func.func @transform_1(%arg0: i32) -> (i32, i32) {
    %c0_i32 = arith.constant 0 : i32
    %c0_i32_0 = arith.constant 0 : i32
    return %c0_i32, %arg0 : i32, i32
  }
  func.func @transform_2(%arg0: i32) -> (i32, i32) {
    %c0_i32 = arith.constant 0 : i32
    %c0_i32_0 = arith.constant 0 : i32
    return %c0_i32, %arg0 : i32, i32
  }
}

</mosaic_0001>

<llo_original>
// kernel: tpu_custom_call.1
$region0: #{tpu_custom_call.1}
  #allocation0 [shape = 'u32[]', space=smem, size = 0x4, offset = 0x4, fixed_abs, tag = 'smem constant byte address 0x4 - core index']
  #allocation1 [shape = 'u32[72,128]{1,0:T(1,128)}', space=vmem, size = 0x9000, scoped, tag = 'internal scratch']
  %s0 = inlined_call_operand.hbm [shape: f32[32,128], index: 0, kind: input, shape index: {}]
  %s1 = inlined_call_operand.hbm [shape: f32[32,128], index: 1, kind: input, shape index: {}]
  %s2 = inlined_call_operand.hbm [shape: f32[1,128], index: 2, kind: output, shape index: {}]
  %s3 = sld [smem:[#allocation0]]
  $region26: #{tpu_custom_call.1} parent=0
    _
  %s5 = ssub.s32 1, %s3
  %s6 = scalar_select 0, %s5, %s3
  $region1: #{tpu_custom_call.1} parent=0
    #allocation2 [shape = 'u8[16384]{0}', space=vmem, size = 0x4000, scoped, tag = 'input window, operand 0, single buffered']
    #allocation3 [shape = 's32[1]{0}', space=sflag, size = 0x4, scoped, tag = 'scoped memory for tpu_custom_call.1']
    #allocation4 [shape = 's32[1]{0}', space=sflag, size = 0x4, scoped, tag = 'scoped memory for tpu_custom_call.1']
    #allocation5 [shape = 'u8[16384]{0}', space=vmem, size = 0x4000, scoped, tag = 'input window, operand 1, single buffered']
    #allocation6 [shape = 's32[1]{0}', space=sflag, size = 0x4, scoped, tag = 'scoped memory for tpu_custom_call.1']
    #allocation7 [shape = 'u8[512]{0}', space=vmem, size = 0x400, scoped, tag = 'output window, operand 0, single buffered']
    %7 = vsyncpa [#allocation3], 0
    %8 = vsyncpa [#allocation6], 0
    %9 = vsyncpa [#allocation4], 0
    // Predicated region
    $region2: #{tpu_custom_call.1} parent=1 // pred_check
      _
    $region3: #{tpu_custom_call.1} parent=1 // pred_check_branch
      %11 = sbr.rel (0) target = $region5
    $region4: #{tpu_custom_call.1} parent=1 // pred_region
      %13 = vsyncadd [#allocation3], 0
      %s14 = sshll.u32 %s0, 4
      %s15 = int_to_ptr.hbm [resolvable:$true] %s14
      %s16 = sshll.u32 [#allocation2], 4
      %s17 = int_to_ptr.vmem [resolvable:$true] %s16
      %22 = dma.hbm_to_vmem [thread:$0]  %s15, 512, %s17, [#allocation3], 128, 128, 8
    $region5: #{tpu_custom_call.1} parent=1 // pred_fallthru
      _
    // Predicated region
    $region6: #{tpu_custom_call.1} parent=1 // pred_check
      _
    $region7: #{tpu_custom_call.1} parent=1 // pred_check_branch
      %24 = sbr.rel (0) target = $region9
    $region8: #{tpu_custom_call.1} parent=1 // pred_region
      %26 = vsyncadd [#allocation6], 0
      %s27 = sshll.u32 %s1, 4
      %s28 = int_to_ptr.hbm [resolvable:$true] %s27
      %s29 = sshll.u32 [#allocation5], 4
      %s30 = int_to_ptr.vmem [resolvable:$true] %s29
      %35 = dma.hbm_to_vmem [thread:$0]  %s28, 512, %s30, [#allocation6], 128, 128, 8
    $region9: #{tpu_custom_call.1} parent=1 // pred_fallthru
      _
    // Predicated region
    $region10: #{tpu_custom_call.1} parent=1 // pred_check
      _
    $region11: #{tpu_custom_call.1} parent=1 // pred_check_branch
      %37 = sbr.rel (0) target = $region13
    $region12: #{tpu_custom_call.1} parent=1 // pred_region
      %39 = dma.done [#allocation3], 512
    $region13: #{tpu_custom_call.1} parent=1 // pred_fallthru
      _
    // Predicated region
    $region14: #{tpu_custom_call.1} parent=1 // pred_check
      _
    $region15: #{tpu_custom_call.1} parent=1 // pred_check_branch
      %41 = sbr.rel (0) target = $region17
    $region16: #{tpu_custom_call.1} parent=1 // pred_region
      %43 = dma.done [#allocation6], 512
    $region17: #{tpu_custom_call.1} parent=1 // pred_fallthru
      _
    %v44 = vld [vmem:[#allocation2] sm:$0xff]
    %v45 = vld [vmem:[#allocation2 + $0x8] sm:$0xff]
    %v46 = vld [vmem:[#allocation2 + $0x10] sm:$0xff]
    %v47 = vld [vmem:[#allocation2 + $0x18] sm:$0xff]
    %v48 = vld [vmem:[#allocation5] sm:$0xff]
    %v49 = vld [vmem:[#allocation5 + $0x8] sm:$0xff]
    %v50 = vld [vmem:[#allocation5 + $0x10] sm:$0xff]
    %v51 = vld [vmem:[#allocation5 + $0x18] sm:$0xff]
    %v52 = vmul.f32 %v44, %v48
    %v53 = vmul.f32 %v45, %v49
    %v54 = vmul.f32 %v46, %v50
    %v55 = vmul.f32 %v47, %v51
    %v56 = vadd.f32 %v52, %v53
    %v57 = vadd.f32 %v56, %v54
    %v58 = vadd.f32 %v57, %v55
    %v59 = vrot.slane %v58, 4
    %v60 = vadd.f32 %v58, %v59
    %v61 = vrot.slane %v60, 2
    %v62 = vadd.f32 %v60, %v61
    %v63 = vrot.slane %v62, 1
    %v64 = vadd.f32 %v62, %v63
    %65 = vst [vmem:[#allocation7] sm:$0x1] %v64
    // Predicated region
    $region18: #{tpu_custom_call.1} parent=1 // pred_check
      _
    $region19: #{tpu_custom_call.1} parent=1 // pred_check_branch
      %67 = sbr.rel (0) target = $region21
    $region20: #{tpu_custom_call.1} parent=1 // pred_region
      %69 = vsyncadd [#allocation4], 0
      %s71 = sshll.u32 [#allocation7], 4
      %s72 = int_to_ptr.vmem [resolvable:$true] %s71
      %s73 = sshll.u32 %s2, 4
      %s74 = int_to_ptr.hbm [resolvable:$true] %s73
      %76 = dma.vmem_to_hbm [thread:$0]  %s72, 16, %s74, [#allocation4]
    $region21: #{tpu_custom_call.1} parent=1 // pred_fallthru
      _
    // Predicated region
    $region22: #{tpu_custom_call.1} parent=1 // pred_check
      _
    $region23: #{tpu_custom_call.1} parent=1 // pred_check_branch
      %78 = sbr.rel (0) target = $region25
    $region24: #{tpu_custom_call.1} parent=1 // pred_region
      %80 = dma.done [#allocation4], 16
    $region25: #{tpu_custom_call.1} parent=1 // pred_fallthru
      _
    %81 = vsyncpa [#allocation3], 1
    %82 = vsyncpa [#allocation6], 1
    %83 = vsyncpa [#allocation4], 1

</llo_original>
